<compile_context>
chip_gen: v7x
topology: tpu7x:2x2x1
jax: 0.10.0
libtpu: 0.0.40
codegen_flags: <defaults>
</compile_context>

<pallas_src>
import math

import jax
import jax.numpy as jnp
from jax import lax
from jax.experimental import pallas as pl
from jax.experimental.pallas import tpu as pltpu


def _pick_tile(dim, candidates):
    """Largest candidate that evenly divides `dim`, else the full dim."""
    for c in candidates:
        if dim >= c and dim % c == 0:
            return c
    return dim


def _sigma_kernel(u_ref, w_ref, v_ref, sig_ref):
    # sigma = sum_{d,c} u[d] * W[d,c] * v[c], accumulated over d_out tiles.
    @pl.when(pl.program_id(0) == 0)
    def _():
        sig_ref[...] = jnp.zeros_like(sig_ref)

    u = u_ref[...].astype(jnp.float32)   # (tn, 1)
    w = w_ref[...].astype(jnp.float32)   # (tn, K)
    v = v_ref[...].astype(jnp.float32)   # (1, K)
    sig_ref[...] += jnp.sum(u * w * v, keepdims=True)   # (1, 1)


def _linear_kernel(scale_ref, x_ref, w_ref, b_ref, o_ref, acc_ref):
    k = pl.program_id(2)

    @pl.when(k == 0)
    def _():
        acc_ref[...] = jnp.zeros_like(acc_ref)

    # out[m, n] += sum_k x[m, k] * W[n, k]  -- contract the last dim of both
    # operands (no transpose of W materialized), native dtype into the MXU,
    # f32 accumulation.
    acc_ref[...] += lax.dot_general(
        x_ref[...], w_ref[...],
        dimension_numbers=(((1,), (1,)), ((), ())),
        preferred_element_type=jnp.float32,
    )

    @pl.when(k == pl.num_programs(2) - 1)
    def _():
        out = acc_ref[...] * scale_ref[0, 0]          # gamma / sigma (SMEM scalar)
        out = out + b_ref[...].astype(jnp.float32)    # (1, tn) broadcast over rows
        o_ref[...] = out.astype(o_ref.dtype)


def sigma_reparam(x, W, b, u, v, gamma):
    """Eval-mode SigmaReparam forward: x @ ((gamma / (u^T W v)) * W).T + b."""
    d_out, d_in = W.shape
    assert x.shape[-1] == d_in
    lead = x.shape[:-1]
    M = math.prod(lead) if lead else 1
    x2 = x.reshape(M, d_in)                           # free reshape (leading dims only)

    # ---------------- sigma = u^T W v (tiny Pallas reduction) ----------------
    tns = _pick_tile(d_out, (512, 256, 128, 64, 32, 16, 8))
    u2 = u.reshape(d_out, 1)
    v2 = v.reshape(1, d_in)
    sigma = pl.pallas_call(
        _sigma_kernel,
        out_shape=jax.ShapeDtypeStruct((1, 1), jnp.float32),
        grid_spec=pltpu.PrefetchScalarGridSpec(
            num_scalar_prefetch=0,
            grid=(d_out // tns,),
            in_specs=[
                pl.BlockSpec((tns, 1), lambda i: (i, 0)),      # u
                pl.BlockSpec((tns, d_in), lambda i: (i, 0)),   # W
                pl.BlockSpec((1, d_in), lambda i: (0, 0)),     # v
            ],
            out_specs=pl.BlockSpec((1, 1), lambda i: (0, 0)),
        ),
        compiler_params=pltpu.CompilerParams(
            dimension_semantics=("arbitrary",)),
    )(u2, W, v2)

    scale = (gamma.reshape(()) / sigma[0, 0]).astype(jnp.float32).reshape(1, 1)

    # ---------------- out = scale * (x @ W^T) + b ----------------------------
    if b is None:
        b = jnp.zeros((d_out,), dtype=x.dtype)
    b2 = b.reshape(1, d_out)

    tm = _pick_tile(M, (256, 128, 64, 32, 16, 8))
    tn = _pick_tile(d_out, (512, 256, 128))
    tk = _pick_tile(d_in, (512, 256, 128))
    grid = (M // tm, d_out // tn, d_in // tk)

    itemsize = jnp.dtype(x.dtype).itemsize
    cost = pl.CostEstimate(
        flops=2 * M * d_out * d_in,
        transcendentals=0,
        bytes_accessed=(M * d_in + d_out * d_in + M * d_out + d_out) * itemsize,
    )

    out2 = pl.pallas_call(
        _linear_kernel,
        out_shape=jax.ShapeDtypeStruct((M, d_out), x.dtype),
        grid_spec=pltpu.PrefetchScalarGridSpec(
            num_scalar_prefetch=0,
            grid=grid,
            in_specs=[
                pl.BlockSpec(memory_space=pltpu.MemorySpace.SMEM),   # scale (1,1)
                pl.BlockSpec((tm, tk), lambda i, j, k: (i, k)),      # x
                pl.BlockSpec((tn, tk), lambda i, j, k: (j, k)),      # W
                pl.BlockSpec((1, tn), lambda i, j, k: (0, j)),       # b
            ],
            out_specs=pl.BlockSpec((tm, tn), lambda i, j, k: (i, j)),
            scratch_shapes=[pltpu.VMEM((tm, tn), jnp.float32)],
        ),
        compiler_params=pltpu.CompilerParams(
            dimension_semantics=("parallel", "parallel", "arbitrary")),
        cost_estimate=cost,
    )(scale, x2, W, b2)

    return out2.reshape(*lead, d_out)


def _reference(x, W, b, u, v, gamma):
    sigma = jnp.einsum("d,dc,c->", u, W, v)
    W_hat = gamma / sigma * W
    out = x @ W_hat.T
    if b is not None:
        out = out + b
    return out


if __name__ == "__main__":
    d_in, d_out = 32, 64
    B, L = 2, 8

    key = jax.random.PRNGKey(0)
    kx, kw, kb, kv = jax.random.split(key, 4)

    x = jax.random.normal(kx, (B, L, d_in), dtype=jnp.float32)
    W = jax.random.normal(kw, (d_out, d_in), dtype=jnp.float32) / math.sqrt(d_in)
    b = 0.1 * jax.random.normal(kb, (d_out,), dtype=jnp.float32)
    v = jax.random.normal(kv, (d_in,), dtype=jnp.float32)
    v = v / jnp.linalg.norm(v)
    u = W @ v                      # one power-iteration step -> sigma comfortably > 0
    u = u / jnp.linalg.norm(u)
    gamma = jnp.ones((1,), dtype=jnp.float32)

    out = sigma_reparam(x, W, b, u, v, gamma)
    out = jax.block_until_ready(out)

    ref = _reference(x, W, b, u, v, gamma)
    assert out.shape == (B, L, d_out)
    assert jnp.allclose(out, ref, atol=1e-4, rtol=1e-4), "mismatch vs reference"

    print("KERNEL_OK")
</pallas_src>

<mosaic_0001>
module attributes {stable_mosaic.version = 11 : i64} {
  func.func @_sigma_kernel(%arg0: i32, %arg1: memref<64x1xf32, #tpu.memory_space<vmem>>, %arg2: memref<64x32xf32, #tpu.memory_space<vmem>>, %arg3: memref<1x32xf32, #tpu.memory_space<vmem>>, %arg4: memref<1x1xf32, #tpu.memory_space<vmem>>) attributes {dimension_semantics = [#tpu.dimension_semantics<arbitrary>], iteration_bounds = array<i64: 1>, scalar_prefetch = 0 : i64, scratch_operands = 0 : i64, tpu.core_type = #tpu.core_type<tc>, window_params = [{transform_indices = @transform_0, window_bounds = array<i64: 64, 1>}, {transform_indices = @transform_1, window_bounds = array<i64: 64, 32>}, {pipeline_mode = #tpu.pipeline_mode<synchronous>, transform_indices = @transform_2, window_bounds = array<i64: 1, 32>}, {pipeline_mode = #tpu.pipeline_mode<synchronous>, transform_indices = @transform_3, window_bounds = array<i64: 1, 1>}]} {
    %c0_i32 = arith.constant 0 : i32
    %0 = arith.cmpi eq, %arg0, %c0_i32 : i32
    %1 = arith.extui %0 : i1 to i32
    %c0_i32_0 = arith.constant 0 : i32
    %2 = arith.cmpi ne, %1, %c0_i32_0 : i32
    scf.if %2 {
      %cst_10 = arith.constant 0.000000e+00 : f32
      %18 = vector.broadcast %cst_10 : f32 to vector<1x1xf32>
      %c0_11 = arith.constant 0 : index
      %c0_12 = arith.constant 0 : index
      %19 = vector.load %arg4[%c0_11, %c0_12] : memref<1x1xf32, #tpu.memory_space<vmem>>, vector<1x1xf32>
      tpu.vector_store %arg4[%c0_11, %c0_12], %18 {strides = array<i32>} : memref<1x1xf32, #tpu.memory_space<vmem>>, vector<1x1xf32>,
    } else {
    }
    %c0 = arith.constant 0 : index
    %c0_1 = arith.constant 0 : index
    %3 = vector.load %arg1[%c0, %c0_1] : memref<64x1xf32, #tpu.memory_space<vmem>>, vector<64x1xf32>
    %c0_2 = arith.constant 0 : index
    %c0_3 = arith.constant 0 : index
    %4 = vector.load %arg2[%c0_2, %c0_3] : memref<64x32xf32, #tpu.memory_space<vmem>>, vector<64x32xf32>
    %c0_4 = arith.constant 0 : index
    %c0_5 = arith.constant 0 : index
    %5 = vector.load %arg3[%c0_4, %c0_5] : memref<1x32xf32, #tpu.memory_space<vmem>>, vector<1x32xf32>
    %c0_6 = arith.constant 0 : index
    %c0_7 = arith.constant 0 : index
    %6 = vector.load %arg4[%c0_6, %c0_7] : memref<1x1xf32, #tpu.memory_space<vmem>>, vector<1x1xf32>
    %7 = vector.broadcast %3 : vector<64x1xf32> to vector<64x32xf32>
    %8 = arith.mulf %7, %4 : vector<64x32xf32>
    %9 = vector.broadcast %5 : vector<1x32xf32> to vector<64x32xf32>
    %10 = arith.mulf %8, %9 : vector<64x32xf32>
    %11 = vector.shape_cast %10 : vector<64x32xf32> to vector<1x64x32xf32>
    %cst = arith.constant dense<0.000000e+00> : vector<1xf32>
    %12 = vector.multi_reduction <add>, %11, %cst [1, 2] : vector<1x64x32xf32> to vector<1xf32>
    %13 = vector.shape_cast %12 : vector<1xf32> to vector<1x1x1xf32>
    %14 = vector.extract %13[0, 0, 0] : f32 from vector<1x1x1xf32>
    %15 = vector.broadcast %14 : f32 to vector<1x1xf32>
    %16 = arith.addf %6, %15 : vector<1x1xf32>
    %c0_8 = arith.constant 0 : index
    %c0_9 = arith.constant 0 : index
    %17 = vector.load %arg4[%c0_8, %c0_9] : memref<1x1xf32, #tpu.memory_space<vmem>>, vector<1x1xf32>
    tpu.vector_store %arg4[%c0_8, %c0_9], %16 {strides = array<i32>} : memref<1x1xf32, #tpu.memory_space<vmem>>, vector<1x1xf32>,
    return
  }
  func.func @transform_0(%arg0: i32) -> (i32, i32) {
    %c0_i32 = arith.constant 0 : i32
    %c0_i32_0 = arith.constant 0 : i32
    return %arg0, %c0_i32 : i32, i32
  }
  func.func @transform_1(%arg0: i32) -> (i32, i32) {
    %c0_i32 = arith.constant 0 : i32
    %c0_i32_0 = arith.constant 0 : i32
    return %arg0, %c0_i32 : i32, i32
  }
  func.func @transform_2(%arg0: i32) -> (i32, i32) {
    %c0_i32 = arith.constant 0 : i32
    %c0_i32_0 = arith.constant 0 : i32
    %c0_i32_1 = arith.constant 0 : i32
    return %c0_i32, %c0_i32_0 : i32, i32
  }
  func.func @transform_3(%arg0: i32) -> (i32, i32) {
    %c0_i32 = arith.constant 0 : i32
    %c0_i32_0 = arith.constant 0 : i32
    %c0_i32_1 = arith.constant 0 : i32
    return %c0_i32, %c0_i32_0 : i32, i32
  }
}

</mosaic_0001>

<llo_original>
// kernel: tpu_custom_call.1
$region0: #{tpu_custom_call.1}
  #allocation0 [shape = 'u32[]', space=smem, size = 0x4, offset = 0x4, fixed_abs, tag = 'smem constant byte address 0x4 - core index']
  #allocation1 [shape = 'u32[144,128]{1,0:T(1,128)}', space=vmem, size = 0x12000, scoped, tag = 'internal scratch']
  %s0 = inlined_call_operand.vmem [shape: f32[64,1], index: 0, kind: input, shape index: {}]
  %s1 = inlined_call_operand.vmem [shape: f32[64,32], index: 1, kind: input, shape index: {}]
  %s2 = inlined_call_operand.vmem [shape: f32[1,32], index: 2, kind: input, shape index: {}]
  %s3 = inlined_call_operand.hbm [shape: f32[1,1], index: 3, kind: output, shape index: {}]
  %s4 = sld [smem:[#allocation0]]
  $region26: #{tpu_custom_call.1} parent=0
    _
  %s6 = ssub.s32 1, %s4
  %s7 = scalar_select 0, %s6, %s4
  $region1: #{tpu_custom_call.1} parent=0
    #allocation2 [shape = 'u8[512]{0}', space=vmem, size = 0x400, scoped, tag = 'output window, operand 0, single buffered']
    #allocation3 [shape = 's32[1]{0}', space=sflag, size = 0x4, scoped, tag = 'scoped memory for tpu_custom_call.1']
    %8 = vsyncpa [#allocation3], 0
    // Predicated region
    $region2: #{tpu_custom_call.1} parent=1 // pred_check
      _
    $region3: #{tpu_custom_call.1} parent=1 // pred_check_branch
      %10 = sbr.rel (0) target = $region5
    $region4: #{tpu_custom_call.1} parent=1 // pred_region
      _
    $region5: #{tpu_custom_call.1} parent=1 // pred_fallthru
      _
    // Predicated region
    $region6: #{tpu_custom_call.1} parent=1 // pred_check
      _
    $region7: #{tpu_custom_call.1} parent=1 // pred_check_branch
      %12 = sbr.rel (0) target = $region9
    $region8: #{tpu_custom_call.1} parent=1 // pred_region
      _
    $region9: #{tpu_custom_call.1} parent=1 // pred_fallthru
      _
    // Predicated region
    $region10: #{tpu_custom_call.1} parent=1 // pred_check
      _
    $region11: #{tpu_custom_call.1} parent=1 // pred_check_branch
      %14 = sbr.rel (0) target = $region13
    $region12: #{tpu_custom_call.1} parent=1 // pred_region
      _
    $region13: #{tpu_custom_call.1} parent=1 // pred_fallthru
      _
    %p15 = scmp.eq.s32.totalorder 0, 0
    // Predicated region
    $region14: #{tpu_custom_call.1} parent=1 // pred_check
      %p16 = pneg %p15
    $region15: #{tpu_custom_call.1} parent=1 // pred_check_branch
      %18 = sbr.rel (%p16) target = $region17
    $region16: #{tpu_custom_call.1} parent=1 // pred_region
      %vm19 = vcmask 0
      %20 = vst.msk [vmem:[#allocation2] sm:$0x1] %vm19, 0.0
    $region17: #{tpu_custom_call.1} parent=1 // pred_fallthru
      _
    %v21 = vld [vmem:[%s0] sm:$0xff]
    %v22 = vld [vmem:[%s0 + $0x8] sm:$0xff]
    %v23 = vld [vmem:[%s0 + $0x10] sm:$0xff]
    %v24 = vld [vmem:[%s0 + $0x18] sm:$0xff]
    %v25 = vld [vmem:[%s0 + $0x20] sm:$0xff]
    %v26 = vld [vmem:[%s0 + $0x28] sm:$0xff]
    %v27 = vld [vmem:[%s0 + $0x30] sm:$0xff]
    %v28 = vld [vmem:[%s0 + $0x38] sm:$0xff]
    %v29 = vld [vmem:[%s1] sm:$0xff]
    %v30 = vld [vmem:[%s1 + $0x8] sm:$0xff]
    %v31 = vld [vmem:[%s1 + $0x10] sm:$0xff]
    %v32 = vld [vmem:[%s1 + $0x18] sm:$0xff]
    %v33 = vld [vmem:[%s1 + $0x20] sm:$0xff]
    %v34 = vld [vmem:[%s1 + $0x28] sm:$0xff]
    %v35 = vld [vmem:[%s1 + $0x30] sm:$0xff]
    %v36 = vld [vmem:[%s1 + $0x38] sm:$0xff]
    %v37 = vld [vmem:[%s2] sm:$0x1]
    %v38 = vld [vmem:[#allocation2] sm:$0x1]
    %40 = vset.pattern.permute.xlu0 0
    %41 = vperm.xlu0 %40, %v21
    %v42 = vpop.permute.xlu0 %41
    %45 = vset.pattern.permute.xlu0 0
    %46 = vperm.xlu0 %45, %v22
    %v47 = vpop.permute.xlu0 %46
    %50 = vset.pattern.permute.xlu0 0
    %51 = vperm.xlu0 %50, %v23
    %v52 = vpop.permute.xlu0 %51
    %55 = vset.pattern.permute.xlu0 0
    %56 = vperm.xlu0 %55, %v24
    %v57 = vpop.permute.xlu0 %56
    %60 = vset.pattern.permute.xlu0 0
    %61 = vperm.xlu0 %60, %v25
    %v62 = vpop.permute.xlu0 %61
    %65 = vset.pattern.permute.xlu0 0
    %66 = vperm.xlu0 %65, %v26
    %v67 = vpop.permute.xlu0 %66
    %70 = vset.pattern.permute.xlu0 0
    %71 = vperm.xlu0 %70, %v27
    %v72 = vpop.permute.xlu0 %71
    %75 = vset.pattern.permute.xlu0 0
    %76 = vperm.xlu0 %75, %v28
    %v77 = vpop.permute.xlu0 %76
    %v79 = vmul.f32 %v42, %v29
    %v80 = vmul.f32 %v47, %v30
    %v81 = vmul.f32 %v52, %v31
    %v82 = vmul.f32 %v57, %v32
    %v83 = vmul.f32 %v62, %v33
    %v84 = vmul.f32 %v67, %v34
    %v85 = vmul.f32 %v72, %v35
    %v86 = vmul.f32 %v77, %v36
    %v88 = vlaneseq
    %v89 = vshrl.u32 %v88, 7
    %v90 = vsub.s32 0, %v89
    %v91 = vrot.slane %v37, %v90
    %v93 = vmul.f32 %v79, %v91
    %v94 = vmul.f32 %v80, %v91
    %v95 = vmul.f32 %v81, %v91
    %v96 = vmul.f32 %v82, %v91
    %v97 = vmul.f32 %v83, %v91
    %v98 = vmul.f32 %v84, %v91
    %v99 = vmul.f32 %v85, %v91
    %v100 = vmul.f32 %v86, %v91
    %vm101 = vcmask 261120
    %v102 = vsel %vm101, %v93, 0.0
    %v103 = vsel %vm101, %v94, 0.0
    %v104 = vadd.f32 %v102, %v103
    %v105 = vsel %vm101, %v95, 0.0
    %v106 = vadd.f32 %v104, %v105
    %v107 = vsel %vm101, %v96, 0.0
    %v108 = vadd.f32 %v106, %v107
    %v109 = vsel %vm101, %v97, 0.0
    %v110 = vadd.f32 %v108, %v109
    %v111 = vsel %vm101, %v98, 0.0
    %v112 = vadd.f32 %v110, %v111
    %v113 = vsel %vm101, %v99, 0.0
    %v114 = vadd.f32 %v112, %v113
    %v115 = vsel %vm101, %v100, 0.0
    %v116 = vadd.f32 %v114, %v115
    %117 = vadd.xlane.f32.xlu0 %v116
    %v118 = vpop.xlane.xlu0 %117
    %v119 = vrot.slane %v118, 4
    %v120 = vadd.f32 %v118, %v119
    %v121 = vrot.slane %v120, 2
    %v122 = vadd.f32 %v120, %v121
    %v123 = vrot.slane %v122, 1
    %v124 = vadd.f32 %v122, %v123
    %s125 = vtos %v124
    %v126 = vstv %s125
    %v127 = vadd.f32 %v38, %v126
    %vm128 = vcmask 0
    %129 = vst.msk [vmem:[#allocation2] sm:$0x1] %vm128, %v127
    // Predicated region
    $region18: #{tpu_custom_call.1} parent=1 // pred_check
      _
    $region19: #{tpu_custom_call.1} parent=1 // pred_check_branch
      %131 = sbr.rel (0) target = $region21
    $region20: #{tpu_custom_call.1} parent=1 // pred_region
      %s133 = ssub.s32 16, 16
      %134 = vsyncadd [#allocation3], %s133
      %s136 = sshll.u32 [#allocation2], 4
      %s137 = int_to_ptr.vmem [resolvable:$true] %s136
      %139 = dma.vmem_to_hbm [thread:$0]  %s137, 16, %s3, [#allocation3]
    $region21: #{tpu_custom_call.1} parent=1 // pred_fallthru
      _
    // Predicated region
    $region22: #{tpu_custom_call.1} parent=1 // pred_check
      _
    $region23: #{tpu_custom_call.1} parent=1 // pred_check_branch
      %141 = sbr.rel (0) target = $region25
    $region24: #{tpu_custom_call.1} parent=1 // pred_region
      %142 = dma.done [#allocation3], 16
    $region25: #{tpu_custom_call.1} parent=1 // pred_fallthru
      _
    %143 = vsyncpa [#allocation3], 1

</llo_original>
